<compile_context>
chip_gen: v6e
topology: v6e:2x2x1
jax: 0.10.0
libtpu: 0.0.40
codegen_flags: <defaults>
</compile_context>

<pallas_src>
import math

import jax
import jax.numpy as jnp
from jax.experimental import pallas as pl
from jax.experimental.pallas import tpu as pltpu


_LANE = 128       # vreg lane width: output last dim padded to a multiple of this
_MIN_TILE = 16    # row-tile multiple (bf16 sublane packing; also covers f32's 8)
_MAX_TILE = 1024  # beyond ~512-1024 rows/tile the pipeline sits at HBM roofline


def _round_up(x, m):
    return ((x + m - 1) // m) * m


# ------------------------------- kernels ----------------------------------- #

def _node_apply_kernel(x_ref, wt_ref, b_ref, o_ref):
    """Full-K path: one MXU matmul per row tile + f32 bias epilogue."""
    acc = jnp.dot(x_ref[...], wt_ref[...], preferred_element_type=jnp.float32)
    o_ref[...] = (acc + b_ref[...]).astype(o_ref.dtype)


def _node_apply_kernel_ktiled(x_ref, wt_ref, b_ref, o_ref, acc_ref):
    """K-tiled path: f32 VMEM accumulator; init at k==0, bias+store at k==last."""
    k = pl.program_id(1)

    @pl.when(k == 0)
    def _():
        acc_ref[...] = jnp.zeros_like(acc_ref)

    acc_ref[...] += jnp.dot(x_ref[...], wt_ref[...],
                            preferred_element_type=jnp.float32)

    @pl.when(k == pl.num_programs(1) - 1)
    def _():
        o_ref[...] = (acc_ref[...] + b_ref[...]).astype(o_ref.dtype)


# ------------------------------- wrapper ------------------------------------ #

def node_apply(h, weight, bias, *, tile_n=None, tile_k=None,
               compute_dtype=jnp.bfloat16):
    """NodeApplyModule forward: h @ weight.T + bias.

    h: (N, in_dim), weight: (out_dim, in_dim), bias: (out_dim,) -> (N, out_dim).
    Wrap in jax.jit (static tile_n / tile_k / compute_dtype) so the parameter
    transpose/pad/cast glue is hoisted and done once per layer, not per call.
    """
    N, in_dim = h.shape
    out_dim, in_dim_w = weight.shape
    assert in_dim_w == in_dim and bias.shape == (out_dim,)
    out_dtype = h.dtype

    # Lane-dense output: pad out_dim up to a multiple of 128.
    out_pad = _round_up(out_dim, _LANE)

    x_bytes = jnp.dtype(compute_dtype).itemsize
    o_bytes = jnp.dtype(out_dtype).itemsize

    # VMEM budget (generation-aware: 64 MiB per TC on v7x, 128 MiB on v5e/v6e).
    try:
        vmem_cap = int(pltpu.get_tpu_info().vmem_capacity_bytes)
    except Exception:
        vmem_cap = 64 << 20                                 # conservative (v7x)
    vmem_limit = min(int(vmem_cap * 3 // 4), 96 << 20)      # compiler headroom
    budget = vmem_limit // 2                                # pipeline working set

    # K (in_dim) tiling: only for large reductions / oversized weight slabs.
    if tile_k is None:
        full_w_bytes = 2 * in_dim * out_pad * x_bytes       # double-buffered slab
        if (in_dim >= 4096 or full_w_bytes > budget // 2) and in_dim % 512 == 0:
            tile_k = 512
        else:
            tile_k = in_dim
    if tile_k != in_dim and (in_dim % tile_k or tile_k % _LANE):
        raise ValueError("tile_k must divide in_dim and be a multiple of 128")
    k_tiled = tile_k != in_dim
    nk = in_dim // tile_k

    # Row tile from the VMEM budget. Resident weight/bias blocks have a constant
    # index_map but are still double-buffered by default -> charge 2 copies.
    resident = 2 * (tile_k * out_pad * x_bytes + out_pad * 4)
    per_row = 2 * (tile_k * x_bytes + out_pad * o_bytes)    # dbl-buffered x / out
    if k_tiled:
        per_row += out_pad * 4                              # f32 acc scratch

    if tile_n is None:
        tile_n = max(_MIN_TILE, (budget - resident) // per_row)
        tile_n = min(tile_n, _MAX_TILE)
        if 2 * tile_n <= N:
            pass                                            # many grid steps: good
        elif N >= 2 * _MIN_TILE:
            # Split rows into >= 2 blocks so the DMA pipeline overlaps and the
            # second TensorCore (v7x megacore) gets work even for modest N.
            tile_n = _round_up(pl.cdiv(N, 2), _MIN_TILE)
        else:
            tile_n = N
    # (8,128)-rule validation for user-supplied tiles: round down to the sublane
    # multiple unless the block covers all rows.
    if tile_n < N and tile_n % _MIN_TILE:
        tile_n = max(_MIN_TILE, (tile_n // _MIN_TILE) * _MIN_TILE)
    tile_n = int(min(tile_n, N))

    # Wrapper glue (hoisted under jit): transpose / cast / pad parameters.
    x = h.astype(compute_dtype)
    wt = weight.T.astype(compute_dtype)                     # (in_dim, out_pad)
    b2 = bias.astype(jnp.float32).reshape(1, out_dim)       # f32 epilogue bias
    if out_pad != out_dim:
        wt = jnp.pad(wt, ((0, 0), (0, out_pad - out_dim)))
        b2 = jnp.pad(b2, ((0, 0), (0, out_pad - out_dim)))

    cost = pl.CostEstimate(
        flops=2 * N * in_dim * out_pad,
        transcendentals=0,
        bytes_accessed=(N * in_dim * x_bytes + in_dim * out_pad * x_bytes
                        + N * out_pad * o_bytes + out_pad * 4),
    )

    if not k_tiled:
        out_padded = pl.pallas_call(
            _node_apply_kernel,
            out_shape=jax.ShapeDtypeStruct((N, out_pad), out_dtype),
            grid_spec=pltpu.PrefetchScalarGridSpec(
                num_scalar_prefetch=0,
                grid=(pl.cdiv(N, tile_n),),
                in_specs=[
                    pl.BlockSpec((tile_n, in_dim), lambda i: (i, 0)),   # x rows
                    pl.BlockSpec((in_dim, out_pad), lambda i: (0, 0)),  # resident W^T
                    pl.BlockSpec((1, out_pad), lambda i: (0, 0)),       # resident bias
                ],
                out_specs=pl.BlockSpec((tile_n, out_pad), lambda i: (i, 0)),
            ),
            compiler_params=pltpu.CompilerParams(
                dimension_semantics=("parallel",),
                vmem_limit_bytes=vmem_limit,
            ),
            cost_estimate=cost,
        )(x, wt, b2)
    else:
        out_padded = pl.pallas_call(
            _node_apply_kernel_ktiled,
            out_shape=jax.ShapeDtypeStruct((N, out_pad), out_dtype),
            grid_spec=pltpu.PrefetchScalarGridSpec(
                num_scalar_prefetch=0,
                grid=(pl.cdiv(N, tile_n), nk),               # reduction axis last
                in_specs=[
                    pl.BlockSpec((tile_n, tile_k), lambda i, k: (i, k)),
                    pl.BlockSpec((tile_k, out_pad), lambda i, k: (k, 0)),
                    pl.BlockSpec((1, out_pad), lambda i, k: (0, 0)),
                ],
                out_specs=pl.BlockSpec((tile_n, out_pad), lambda i, k: (i, 0)),
                scratch_shapes=[pltpu.VMEM((tile_n, out_pad), jnp.float32)],
            ),
            compiler_params=pltpu.CompilerParams(
                dimension_semantics=("parallel", "arbitrary"),
                vmem_limit_bytes=vmem_limit,
            ),
            cost_estimate=cost,
        )(x, wt, b2)

    return out_padded[:, :out_dim] if out_pad != out_dim else out_padded


def init_linear_params(key, in_dim, out_dim, dtype=jnp.float32):
    # Deterministic init mirroring nn.Linear: U(-1/sqrt(in_dim), 1/sqrt(in_dim)).
    kw, kb = jax.random.split(key)
    bound = 1.0 / math.sqrt(in_dim)
    weight = jax.random.uniform(kw, (out_dim, in_dim), dtype, -bound, bound)
    bias = jax.random.uniform(kb, (out_dim,), dtype, -bound, bound)
    return weight, bias


if __name__ == "__main__":
    key = jax.random.PRNGKey(0)
    k_h1, k_p1, k_h2, k_p2 = jax.random.split(key, 4)

    apply_fn = jax.jit(node_apply,
                       static_argnames=("tile_n", "tile_k", "compute_dtype"))

    # --- Test 1: small GCN-like shapes, default bf16 MXU feed + auto tiling ---
    N, in_dim, out_dim = 64, 32, 32
    h = jax.random.normal(k_h1, (N, in_dim), dtype=jnp.float32)
    w, b = init_linear_params(k_p1, in_dim, out_dim)

    out = jax.block_until_ready(apply_fn(h, w, b))
    ref = h @ w.T + b
    assert out.shape == ref.shape and out.dtype == ref.dtype
    assert jnp.allclose(out, ref, atol=5e-2, rtol=5e-2), "bf16 path mismatch"

    # --- Test 2: exercise row tiling + K-axis accumulator + padded/ragged out --
    N2, in2, out2 = 96, 256, 48
    h2 = jax.random.normal(k_h2, (N2, in2), dtype=jnp.float32)
    w2, b2 = init_linear_params(k_p2, in2, out2)

    out2_ = jax.block_until_ready(
        apply_fn(h2, w2, b2, tile_n=64, tile_k=128, compute_dtype=jnp.float32))
    ref2 = h2 @ w2.T + b2
    assert out2_.shape == ref2.shape
    assert jnp.allclose(out2_, ref2, atol=2e-2, rtol=2e-2), "k-tiled path mismatch"

    print("KERNEL_OK")
</pallas_src>

<mosaic_0001>
module attributes {stable_mosaic.version = 11 : i64} {
  func.func @_node_apply_kernel(%arg0: i32, %arg1: memref<32x32xbf16, #tpu.memory_space<vmem>>, %arg2: memref<32x128xbf16, #tpu.memory_space<vmem>>, %arg3: memref<1x128xf32, #tpu.memory_space<vmem>>, %arg4: memref<32x128xf32, #tpu.memory_space<vmem>>) attributes {dimension_semantics = [#tpu.dimension_semantics<parallel>], iteration_bounds = array<i64: 2>, scalar_prefetch = 0 : i64, scratch_operands = 0 : i64, tpu.core_type = #tpu.core_type<tc>, window_params = [{transform_indices = @transform_0, window_bounds = array<i64: 32, 32>}, {pipeline_mode = #tpu.pipeline_mode<synchronous>, transform_indices = @transform_1, window_bounds = array<i64: 32, 128>}, {pipeline_mode = #tpu.pipeline_mode<synchronous>, transform_indices = @transform_2, window_bounds = array<i64: 1, 128>}, {transform_indices = @transform_3, window_bounds = array<i64: 32, 128>}]} {
    %c0 = arith.constant 0 : index
    %c0_0 = arith.constant 0 : index
    %0 = vector.load %arg1[%c0, %c0_0] : memref<32x32xbf16, #tpu.memory_space<vmem>>, vector<32x32xbf16>
    %c0_1 = arith.constant 0 : index
    %c0_2 = arith.constant 0 : index
    %1 = vector.load %arg2[%c0_1, %c0_2] : memref<32x128xbf16, #tpu.memory_space<vmem>>, vector<32x128xbf16>
    %cst = arith.constant dense<0.000000e+00> : vector<32x128xf32>
    %2 = tpu.matmul %0, %1, %cst {dimension_numbers = #tpu.dot_dimension_numbers<[1], [0], [0], [1], [0, 0, 1, 1], [], []>} : vector<32x32xbf16>, vector<32x128xbf16>, vector<32x128xf32> -> vector<32x128xf32>
    %c0_3 = arith.constant 0 : index
    %c0_4 = arith.constant 0 : index
    %3 = vector.load %arg3[%c0_3, %c0_4] : memref<1x128xf32, #tpu.memory_space<vmem>>, vector<1x128xf32>
    %4 = vector.broadcast %3 : vector<1x128xf32> to vector<32x128xf32>
    %5 = arith.addf %2, %4 : vector<32x128xf32>
    %c0_5 = arith.constant 0 : index
    %c0_6 = arith.constant 0 : index
    %6 = vector.load %arg4[%c0_5, %c0_6] : memref<32x128xf32, #tpu.memory_space<vmem>>, vector<32x128xf32>
    tpu.vector_store %arg4[%c0_5, %c0_6], %5 {strides = array<i32>} : memref<32x128xf32, #tpu.memory_space<vmem>>, vector<32x128xf32>,
    return
  }
  func.func @transform_0(%arg0: i32) -> (i32, i32) {
    %c0_i32 = arith.constant 0 : i32
    %c0_i32_0 = arith.constant 0 : i32
    return %arg0, %c0_i32 : i32, i32
  }
  func.func @transform_1(%arg0: i32) -> (i32, i32) {
    %c0_i32 = arith.constant 0 : i32
    %c0_i32_0 = arith.constant 0 : i32
    %c0_i32_1 = arith.constant 0 : i32
    return %c0_i32, %c0_i32_0 : i32, i32
  }
  func.func @transform_2(%arg0: i32) -> (i32, i32) {
    %c0_i32 = arith.constant 0 : i32
    %c0_i32_0 = arith.constant 0 : i32
    %c0_i32_1 = arith.constant 0 : i32
    return %c0_i32, %c0_i32_0 : i32, i32
  }
  func.func @transform_3(%arg0: i32) -> (i32, i32) {
    %c0_i32 = arith.constant 0 : i32
    %c0_i32_0 = arith.constant 0 : i32
    return %arg0, %c0_i32 : i32, i32
  }
}

</mosaic_0001>

<llo_original>
// kernel: node_apply.1
$region0: #{node_apply.1}
  #allocation0 [shape = 'u32[]', space=smem, size = 0x4, offset = 0x4, fixed_abs, tag = 'smem constant byte address 0x4 - core index']
  #allocation1 [shape = 'u32[144,128]{1,0:T(1,128)}', space=vmem, size = 0x12000, scoped, tag = 'internal scratch']
  %s0 = inlined_call_operand.vmem [shape: bf16[64,32], index: 0, kind: input, shape index: {}]
  %s1 = inlined_call_operand.vmem [shape: bf16[32,128], index: 1, kind: input, shape index: {}]
  %s2 = inlined_call_operand.vmem [shape: f32[1,128], index: 2, kind: input, shape index: {}]
  %s3 = inlined_call_operand.vmem [shape: f32[64,128], index: 3, kind: output, shape index: {}]
  %s4 = sld [smem:[#allocation0]]
  $region45: #{node_apply.1} parent=0
    _
  %s6 = ssub.s32 1, %s4
  %s7 = scalar_select 0, %s6, %s4
  loop: start=0, step=1, limit=4
  $region2: #{node_apply.1} parent=0 // loop_pre_header
    _
  $region3: #{node_apply.1} parent=0 // loop_header
    %s9 = sphi 0, %s13
    %p10 = scmp.ge.s32.totalorder %s9, 4
    %s19 = sphi 0, %s21
    %s22 = sphi 0, %s19
    %s23 = sphi 0, %s22
    %s39 = sphi 0, %s23
    %s43 = sphi 0, %s43
    %s45 = sphi 0, %s43
    %s46 = sphi 0, %s45
    %s60 = sphi 0, %s46
    %s64 = sphi 0, %s64
    %s66 = sphi 0, %s64
    %s67 = sphi 0, %s66
    %s81 = sphi 0, %s67
    %s87 = sphi 0, %s89
    %s90 = sphi 0, %s87
    %s91 = sphi 0, %s90
    %s107 = sphi 0, %s91
  $region4: #{node_apply.1} parent=0 // loop_header_branch
    %12 = sbr.rel (%p10) target = $region8
  $region5: #{node_apply.1} parent=0 // loop_body
    %s14 = ssub.s32 %s9, 1
    %s15 = ssub.s32 %s9, 2
    %s16 = sadd.s32 %s9, 1
    %s17 = ssub.s32 %s9, %s16
    %p18 = scmp.eq.s32.totalorder %s17, 0
    %s20 = sadd.s32 %s19, 1
    %s21 = scalar_select %p18, %s19, %s20
    %p24 = pneg %p18
    %p25 = scmp.eq.s32.totalorder %s9, 1
    %p26 = por %p24, %p25
    %p27 = scmp.ne.s32.totalorder %s19, %s22
    %p28 = scmp.eq.s32.totalorder %s9, 0
    %p29 = por %p27, %p28
    %p30 = scmp.ne.s32.totalorder %s19, %s22
    %p31 = scmp.eq.s32.totalorder %s14, 1
    %p32 = por %p30, %p31
    %p33 = scmp.ne.s32.totalorder %s22, %s23
    %p34 = scmp.eq.s32.totalorder %s14, 0
    %p35 = por %p33, %p34
    %p36 = scmp.ne.s32.totalorder %s22, %s23
    %p37 = scmp.eq.s32.totalorder %s15, 1
    %p38 = por %p36, %p37
    %p40 = scmp.ne.s32.totalorder %s23, %s39
    %p41 = scmp.eq.s32.totalorder %s15, 0
    %p42 = por %p40, %p41
    %s44 = sadd.s32 %s43, 1
    %p47 = scmp.eq.s32.totalorder %s9, 1
    %p48 = scmp.ne.s32.totalorder %s43, %s45
    %p49 = scmp.eq.s32.totalorder %s9, 0
    %p50 = por %p48, %p49
    %p51 = scmp.ne.s32.totalorder %s43, %s45
    %p52 = scmp.eq.s32.totalorder %s14, 1
    %p53 = por %p51, %p52
    %p54 = scmp.ne.s32.totalorder %s45, %s46
    %p55 = scmp.eq.s32.totalorder %s14, 0
    %p56 = por %p54, %p55
    %p57 = scmp.ne.s32.totalorder %s45, %s46
    %p58 = scmp.eq.s32.totalorder %s15, 1
    %p59 = por %p57, %p58
    %p61 = scmp.ne.s32.totalorder %s46, %s60
    %p62 = scmp.eq.s32.totalorder %s15, 0
    %p63 = por %p61, %p62
    %s65 = sadd.s32 %s64, 1
    %p68 = scmp.eq.s32.totalorder %s9, 1
    %p69 = scmp.ne.s32.totalorder %s64, %s66
    %p70 = scmp.eq.s32.totalorder %s9, 0
    %p71 = por %p69, %p70
    %p72 = scmp.ne.s32.totalorder %s64, %s66
    %p73 = scmp.eq.s32.totalorder %s14, 1
    %p74 = por %p72, %p73
    %p75 = scmp.ne.s32.totalorder %s66, %s67
    %p76 = scmp.eq.s32.totalorder %s14, 0
    %p77 = por %p75, %p76
    %p78 = scmp.ne.s32.totalorder %s66, %s67
    %p79 = scmp.eq.s32.totalorder %s15, 1
    %p80 = por %p78, %p79
    %p82 = scmp.ne.s32.totalorder %s67, %s81
    %p83 = scmp.eq.s32.totalorder %s15, 0
    %p84 = por %p82, %p83
    %s85 = ssub.s32 %s9, %s16
    %p86 = scmp.eq.s32.totalorder %s85, 0
    %s88 = sadd.s32 %s87, 1
    %s89 = scalar_select %p86, %s87, %s88
    %p92 = pneg %p86
    %p93 = scmp.eq.s32.totalorder %s9, 1
    %p94 = por %p92, %p93
    %p95 = scmp.ne.s32.totalorder %s87, %s90
    %p96 = scmp.eq.s32.totalorder %s9, 0
    %p97 = por %p95, %p96
    %p98 = scmp.ne.s32.totalorder %s87, %s90
    %p99 = scmp.eq.s32.totalorder %s14, 1
    %p100 = por %p98, %p99
    %p101 = scmp.ne.s32.totalorder %s90, %s91
    %p102 = scmp.eq.s32.totalorder %s14, 0
    %p103 = por %p101, %p102
    %p104 = scmp.ne.s32.totalorder %s90, %s91
    %p105 = scmp.eq.s32.totalorder %s15, 1
    %p106 = por %p104, %p105
    %p108 = scmp.ne.s32.totalorder %s91, %s107
    %p109 = scmp.eq.s32.totalorder %s15, 0
    %p110 = por %p108, %p109
    %p111 = scmp.le.s32.totalorder 1, %s9
    %p112 = scmp.lt.s32.totalorder %s9, 3
    %p113 = pnand %p111, %p112
    %p114 = pneg %p113
    // Predicated region
    $region9: #{node_apply.1} parent=5 // pred_check
      _
    $region10: #{node_apply.1} parent=5 // pred_check_branch
      %116 = sbr.rel (%p113) target = $region12
    $region11: #{node_apply.1} parent=5 // pred_region
      %s117 = ssub.s32 %s9, 1
      // Predicated region
      $region13: #{node_apply.1} parent=11 // pred_check
        %p118 = pneg %p56
      $region14: #{node_apply.1} parent=11 // pred_check_branch
        %120 = sbr.rel (%p118) target = $region16
      $region15: #{node_apply.1} parent=11 // pred_region
        _
      $region16: #{node_apply.1} parent=11 // pred_fallthru
        _
      // Predicated region
      $region17: #{node_apply.1} parent=11 // pred_check
        %p121 = pneg %p77
      $region18: #{node_apply.1} parent=11 // pred_check_branch
        %123 = sbr.rel (%p121) target = $region20
      $region19: #{node_apply.1} parent=11 // pred_region
        _
      $region20: #{node_apply.1} parent=11 // pred_fallthru
        _
    $region12: #{node_apply.1} parent=5 // pred_fallthru
      _
    %p124 = scmp.lt.s32.totalorder %s9, 2
    // Predicated region
    $region21: #{node_apply.1} parent=5 // pred_check
      %p125 = pneg %p124
    $region22: #{node_apply.1} parent=5 // pred_check_branch
      %127 = sbr.rel (%p125) target = $region24
    $region23: #{node_apply.1} parent=5 // pred_region
      // Predicated region
      $region25: #{node_apply.1} parent=23 // pred_check
        %p128 = pneg %p29
      $region26: #{node_apply.1} parent=23 // pred_check_branch
        %130 = sbr.rel (%p128) target = $region28
      $region27: #{node_apply.1} parent=23 // pred_region
        %s131 = smul.u32 4, %s9
        %p132 = scmp.lt.s32.totalorder %s131, 7
        %s133 = scalar_select %p132, %s131, 7
        %s134 = smul.addr %s133, 4
        %s135 = scalar_lea.vmem %s0, %s134
        %s136 = smul.u32 4, %s9
      $region28: #{node_apply.1} parent=23 // pred_fallthru
        _
    $region24: #{node_apply.1} parent=5 // pred_fallthru
      _
    %p137 = scmp.le.s32.totalorder 1, %s9
    %p138 = scmp.lt.s32.totalorder %s9, 3
    %p139 = pnand %p137, %p138
    %p140 = pneg %p139
    // Predicated region
    $region29: #{node_apply.1} parent=5 // pred_check
      _
    $region30: #{node_apply.1} parent=5 // pred_check_branch
      %142 = sbr.rel (%p139) target = $region32
    $region31: #{node_apply.1} parent=5 // pred_region
      %s143 = ssub.s32 %s9, 1
      %s144 = smul.u32 4, %s14
      %p145 = scmp.lt.s32.totalorder %s144, 7
      %s146 = scalar_select %p145, %s144, 7
      %s147 = smul.addr %s146, 4
      %s148 = scalar_lea.vmem %s0, %s147
      %p149 = pneg %p35
      %p150 = pneg %p32
      %p151 = pneg %p56
      %p152 = pneg %p53
      %p153 = pneg %p77
      %p154 = pneg %p74
      %p155 = pneg %p103
      %p156 = pneg %p100
      %s157 = smul.u32 4, %s14
      %p158 = scmp.lt.s32.totalorder %s157, 7
      %s159 = scalar_select %p158, %s157, 7
      %s160 = smul.addr %s159, 8
      %s161 = scalar_lea.vmem %s3, %s160
      %s162 = smul.u32 4, %s14
      %p163 = scmp.lt.s32.totalorder %s162, 7
      %s164 = scalar_select %p163, %s162, 7
      %s165 = smul.addr %s164, 4
      %s166 = scalar_lea.vmem %s0, %s165
      %s167 = smul.u32 4, %s14
      %s168 = smul.u32 4, %s14
      %p169 = scmp.lt.s32.totalorder %s168, 7
      %s170 = scalar_select %p169, %s168, 7
      %s171 = smul.addr %s170, 8
      %s172 = scalar_lea.vmem %s3, %s171
      %s173 = smul.u32 4, %s14
      %v175 = vld [vmem:[%s166] sm:$0xf]
      %v176 = vld [vmem:[%s166 + $0x4] sm:$0xf]
      %v177 = vld [vmem:[%s166 + $0x8] sm:$0xf]
      %v178 = vld [vmem:[%s166 + $0xc] sm:$0xf]
      %v179 = vld [vmem:[%s1] sm:$0xf]
      %v180 = vld [vmem:[%s1 + $0x4] sm:$0xf]
      %v181 = vld [vmem:[%s1 + $0x8] sm:$0xf]
      %v182 = vld [vmem:[%s1 + $0xc] sm:$0xf]
      %v183 = vld [vmem:[%s2] sm:$0x1]
      %v185 = vlaneseq
      %v186 = vshrl.u32 %v185, 7
      %v187 = vsub.s32 0, %v186
      %v188 = vrot.slane %v183, %v187
      %v194 = vunpack.c.l.b16 %v175
      %v195 = vunpack.c.l.b16 %v176
      %v196 = vunpack.c.l.b16 %v177
      %v197 = vunpack.c.l.b16 %v178
      %v198 = vpack.c.b16 %v195, %v194
      %v199 = vpack.c.b16 %v197, %v196
      %v204 = vunpack.c.l.b16 %v179
      %v205 = vunpack.c.l.b16 %v180
      %v206 = vunpack.c.l.b16 %v181
      %v207 = vunpack.c.l.b16 %v182
      %v208 = vpack.c.b16 %v205, %v204
      %v209 = vpack.c.b16 %v207, %v206
      %vm212 = vcmask 261120
      %v214 = vsel %vm212, %v198, 0
      %v217 = vsel %vm212, %v199, 0
      %219 = vmatprep.subr.bf16.mxu0 0
      %220 = vmatpush1.bf16.msra.mxu0 0
      %221 = vmatprep.subr.bf16.mxu0 0
      %222 = vmatpush1.bf16.msra.mxu0 0
      %223 = vmatprep.subr.bf16.mxu0 0
      %224 = vmatpush1.bf16.msra.mxu0 0
      %225 = vmatprep.subr.bf16.mxu0 0
      %226 = vmatpush1.bf16.msra.mxu0 0
      %227 = vmatprep.subr.bf16.mxu0 0
      %228 = vmatpush1.bf16.msra.mxu0 0
      %229 = vmatprep.subr.bf16.mxu0 0
      %230 = vmatpush1.bf16.msra.mxu0 0
      %231 = vmatprep.subr.bf16.mxu0 0
      %232 = vmatpush1.bf16.msra.mxu0 %v209
      %233 = vmatprep.subr.bf16.mxu0 0
      %234 = vmatpush1.bf16.msra.mxu0 %v208
      %235 = vmatprep.subr.bf16.mxu0 0
      %236 = vmatpush2.bf16.msra.mxu0 0
      %237 = vmatprep.subr.bf16.mxu0 0
      %238 = vmatpush2.bf16.msra.mxu0 0
      %239 = vmatprep.subr.bf16.mxu0 0
      %240 = vmatpush2.bf16.msra.mxu0 0
      %241 = vmatprep.subr.bf16.mxu0 0
      %242 = vmatpush2.bf16.msra.mxu0 0
      %243 = vmatprep.subr.bf16.mxu0 0
      %244 = vmatpush2.bf16.msra.mxu0 0
      %245 = vmatprep.subr.bf16.mxu0 0
      %246 = vmatpush2.bf16.msra.mxu0 0
      %247 = vmatprep.subr.bf16.mxu0 0
      %248 = vmatpush2.bf16.msra.mxu0 0
      %249 = vmatprep.subr.bf16.mxu0 0
      %250 = vmatpush2.bf16.msra.mxu0 0
      %251 = vmatprep.mubr.bf16.mxu0 0
      %252 = vmatmul.mubr.bf16.gmra.mxu0 %v214
      %v253 = vpop.f32.mrf.mxu0
      %v254 = vadd.f32 %v188, %v253
      %v255 = vpop.f32.mrf.mxu0
      %v256 = vpop.f32.mrf.mxu0
      %v257 = vadd.f32 %v188, %v256
      %v258 = vpop.f32.mrf.mxu0
      %259 = vmatprep.mubr.bf16.mxu0 0
      %260 = vmatmul.mubr.bf16.gmra.mxu0 %v217
      %v261 = vpop.f32.mrf.mxu0
      %v262 = vadd.f32 %v188, %v261
      %v263 = vpop.f32.mrf.mxu0
      %v264 = vpop.f32.mrf.mxu0
      %v265 = vadd.f32 %v188, %v264
      %v266 = vpop.f32.mrf.mxu0
      %267 = vdwg.mxu0
      %268 = vst [vmem:[%s172] sm:$0xff] %v254
      %269 = vst [vmem:[%s172 + $0x8] sm:$0xff] %v257
      %270 = vst [vmem:[%s172 + $0x10] sm:$0xff] %v262
      %271 = vst [vmem:[%s172 + $0x18] sm:$0xff] %v265
      %s272 = smul.u32 4, %s14
      %p273 = scmp.lt.s32.totalorder %s272, 7
      %s274 = scalar_select %p273, %s272, 7
      %s275 = smul.addr %s274, 8
      %s276 = scalar_lea.vmem %s3, %s275
      // Predicated region
      $region33: #{node_apply.1} parent=31 // pred_check
        %p277 = pneg %p100
      $region34: #{node_apply.1} parent=31 // pred_check_branch
        %279 = sbr.rel (%p277) target = $region36
      $region35: #{node_apply.1} parent=31 // pred_region
        %s280 = smul.u32 4, %s14
      $region36: #{node_apply.1} parent=31 // pred_fallthru
        _
    $region32: #{node_apply.1} parent=5 // pred_fallthru
      _
    %p281 = scmp.le.s32.totalorder 2, %s9
    // Predicated region
    $region37: #{node_apply.1} parent=5 // pred_check
      %p282 = pneg %p281
    $region38: #{node_apply.1} parent=5 // pred_check_branch
      %284 = sbr.rel (%p282) target = $region40
    $region39: #{node_apply.1} parent=5 // pred_region
      %s285 = ssub.s32 %s9, 2
      // Predicated region
      $region41: #{node_apply.1} parent=39 // pred_check
        %p286 = pneg %p106
      $region42: #{node_apply.1} parent=39 // pred_check_branch
        %288 = sbr.rel (%p286) target = $region44
      $region43: #{node_apply.1} parent=39 // pred_region
        %s289 = smul.u32 4, %s15
        %p290 = scmp.lt.s32.totalorder %s289, 7
        %s291 = scalar_select %p290, %s289, 7
        %s292 = smul.addr %s291, 8
        %s293 = scalar_lea.vmem %s3, %s292
      $region44: #{node_apply.1} parent=39 // pred_fallthru
        _
    $region40: #{node_apply.1} parent=5 // pred_fallthru
      _
  $region6: #{node_apply.1} parent=0 // loop_footer
    %s13 = sadd.s32 1, %s9
  $region7: #{node_apply.1} parent=0 // loop_footer_branch
    %8 = sbr.rel target = $region3
  $region8: #{node_apply.1} parent=0 // loop_exit
    _

</llo_original>
